<compile_context>
chip_gen: v5e
topology: v5e:2x2
jax: 0.10.0
libtpu: 0.0.40
codegen_flags: <defaults>
</compile_context>

<pallas_src>
import functools
import math

import jax
import jax.numpy as jnp
from jax import lax
from jax.experimental import pallas as pl
from jax.experimental.pallas import tpu as pltpu

MAX_K = 32
HID = 32                                   # k_lambda_net_hid_size
OUT_DIM = 2 + int(math.log(MAX_K, 2))      # = 7 for max_k = 32
OUT_PAD = 8                                # per-row padded logits (7 real + 1 pad)
PACK = 4                                   # original rows packed per 128-lane row
LANES = PACK * MAX_K                       # = 128
OUT_LANES = PACK * OUT_PAD                 # = 32
NEG_BIG = -1e30                            # pad bias -> exp() == 0 in softmax
CHUNK_P = 64                               # packed rows per register-resident chunk


def meta_k_kernel(dist_ref, vals_ref, w1d_ref, w1c_ref, b1_ref,
                  w2_ref, b2_ref, seg_ref, out_ref, *, chunk, num_chunks):
    """Processes (tp, 128) packed tiles chunk-by-chunk, end-to-end per chunk."""

    def chunk_body(c, carry):
        r0 = pl.multiple_of(c * chunk, chunk)
        v = vals_ref[pl.ds(r0, chunk), :]         # (chunk, 128) int32, 4 rows/vrow
        dist = dist_ref[pl.ds(r0, chunk), :]      # (chunk, 128) f32

        # ---- label-count-segment feature (packed) ------------------------
        # first_occ[., 32g+k] = 1 iff element k of original row is non-zero and
        # no earlier element of the SAME row equals it.  31 lane rotations
        # (XLU) + int/bool compares (VPU); `(lane & 31) >= d` masks lanes whose
        # roll source crosses a packed-row-group (or vreg wrap) boundary.
        lane = lax.broadcasted_iota(jnp.int32, (chunk, LANES), 1)
        lane_mod = lane & (MAX_K - 1)             # position within each packed row
        seen = lane_mod < 0                       # all-False (chunk, 128) bool
        for d in range(1, MAX_K):
            rolled = pltpu.roll(v, shift=d, axis=1)      # rolled[:, j] = v[:, j-d]
            seen = seen | ((v == rolled) & (lane_mod >= d))
        focc = jnp.where((v != 0) & jnp.logical_not(seen), 1.0, 0.0)  # f32

        # ---- MLP (block-diagonal weights keep the packed layout) ---------
        # The upper-triangular prefix-sum matrix is pre-folded into w1c on the
        # host, so first_occ feeds the first Linear directly.
        h = jnp.tanh(
            jnp.dot(dist, w1d_ref[...], preferred_element_type=jnp.float32)
            + jnp.dot(focc, w1c_ref[...], preferred_element_type=jnp.float32)
            + b1_ref[...])                                     # (chunk, 128)
        logits = (jnp.dot(h, w2_ref[...], preferred_element_type=jnp.float32)
                  + b2_ref[...])                               # (chunk, 32)

        # ---- segmented softmax over 8-lane groups -------------------------
        # Subtracting the full 32-lane row max subtracts a constant per
        # 8-lane segment (softmax-invariant) and keeps exp() <= 1; the padded
        # lane's -1e30 bias underflows exp() to exactly 0.  Segment sums are a
        # tiny matmul against a block-diagonal ones matrix.
        m = jnp.max(logits, axis=-1, keepdims=True)
        e = jnp.exp(logits - m)
        s = jnp.dot(e, seg_ref[...], preferred_element_type=jnp.float32)
        out_ref[pl.ds(r0, chunk), :] = (e / s).astype(out_ref.dtype)
        return carry

    lax.fori_loop(0, num_chunks, chunk_body, 0)


def _round_up(x, m):
    return (x + m - 1) // m * m


def meta_k_network(distances, values, params, *, tile_rows=8192):
    """distances: (B,S,K) float; values: (B,S,K) int (retrieved token ids >= 0)."""
    B, S, K = distances.shape
    assert K == MAX_K
    N = B * S
    Np = pl.cdiv(N, PACK)                       # packed rows holding real data

    # Packed-row tile: as big as requested, clamped so large inputs still give
    # ~>=4 grid steps (balanced megacore sharding on v7x); rows are padded.
    tp = max(8, min(tile_rows // PACK, _round_up(pl.cdiv(Np, 4), 8)))
    tp = _round_up(tp, 8)
    if tp >= CHUNK_P:
        tp = _round_up(tp, CHUNK_P)
        chunk = CHUNK_P
    else:
        chunk = tp
    num_chunks = tp // chunk

    np_pad = _round_up(Np, tp)
    n_pad = np_pad * PACK

    dist2 = distances.reshape(N, K).astype(jnp.float32)
    vals2 = values.reshape(N, K).astype(jnp.int32)
    if n_pad != N:
        dist2 = jnp.pad(dist2, ((0, n_pad - N), (0, 0)))
        vals2 = jnp.pad(vals2, ((0, n_pad - N), (0, 0)))
    dist_p = dist2.reshape(np_pad, LANES)       # free contiguous reshape (4 rows/128 lanes)
    vals_p = vals2.reshape(np_pad, LANES)

    w1d, w1c, b1, w2, b2 = params
    # Fold the inclusive prefix-sum into the count half of the first Linear:
    # counts @ w1c == (first_occ @ tri) @ w1c == first_occ @ (tri @ w1c).
    tri_incl = (jnp.arange(K)[:, None] <= jnp.arange(K)[None, :]).astype(jnp.float32)
    w1c_folded = jnp.dot(tri_incl, w1c, precision=jax.lax.Precision.HIGHEST)

    # Block-diagonal weights so the packed (4-rows-per-vrow) layout is kept
    # through both Linears and the softmax; second Linear padded to 8 lanes/row
    # (zero weights, -1e30 bias) so the pad lane softmaxes to exactly 0.
    eye4 = jnp.eye(PACK, dtype=jnp.float32)
    w1d_blk = jnp.kron(eye4, w1d)                                  # (128, 128)
    w1c_blk = jnp.kron(eye4, w1c_folded)                           # (128, 128)
    b1_blk = jnp.tile(b1, (1, PACK))                               # (1, 128)
    w2p = jnp.zeros((HID, OUT_PAD), jnp.float32).at[:, :OUT_DIM].set(w2)
    b2p = jnp.full((1, OUT_PAD), NEG_BIG, jnp.float32).at[:, :OUT_DIM].set(b2)
    w2_blk = jnp.kron(eye4, w2p)                                   # (128, 32)
    b2_blk = jnp.tile(b2p, (1, PACK))                              # (1, 32)
    seg = jnp.kron(eye4, jnp.ones((OUT_PAD, OUT_PAD), jnp.float32))  # (32, 32)

    grid = (np_pad // tp,)
    flops = np_pad * (2 * 2 * LANES * LANES + 2 * LANES * OUT_LANES
                      + 2 * OUT_LANES * OUT_LANES)
    transcendentals = np_pad * (LANES + OUT_LANES)
    bytes_accessed = (np_pad * (2 * LANES + OUT_LANES) * 4
                      + 4 * (2 * LANES * LANES + LANES + LANES * OUT_LANES
                             + OUT_LANES + OUT_LANES * OUT_LANES))

    kernel = functools.partial(meta_k_kernel, chunk=chunk, num_chunks=num_chunks)
    out = pl.pallas_call(
        kernel,
        out_shape=jax.ShapeDtypeStruct((np_pad, OUT_LANES), jnp.float32),
        grid_spec=pltpu.PrefetchScalarGridSpec(
            num_scalar_prefetch=0,
            grid=grid,
            in_specs=[
                pl.BlockSpec((tp, LANES), lambda i: (i, 0)),          # distances (packed)
                pl.BlockSpec((tp, LANES), lambda i: (i, 0)),          # values (packed)
                pl.BlockSpec((LANES, LANES), lambda i: (0, 0)),       # W1 dist half (block-diag)
                pl.BlockSpec((LANES, LANES), lambda i: (0, 0)),       # W1 count half (tri-folded)
                pl.BlockSpec((1, LANES), lambda i: (0, 0)),           # b1
                pl.BlockSpec((LANES, OUT_LANES), lambda i: (0, 0)),   # W2 (block-diag, padded)
                pl.BlockSpec((1, OUT_LANES), lambda i: (0, 0)),       # b2 (padded)
                pl.BlockSpec((OUT_LANES, OUT_LANES), lambda i: (0, 0)),  # segment-sum ones
            ],
            out_specs=pl.BlockSpec((tp, OUT_LANES), lambda i: (i, 0)),
        ),
        compiler_params=pltpu.CompilerParams(
            dimension_semantics=("parallel",),
            vmem_limit_bytes=32 * 1024 * 1024,
        ),
        cost_estimate=pl.CostEstimate(
            flops=int(flops),
            transcendentals=int(transcendentals),
            bytes_accessed=int(bytes_accessed),
        ),
    )(dist_p, vals_p, w1d_blk, w1c_blk, b1_blk, w2_blk, b2_blk, seg)

    # Free contiguous reshapes: (np_pad, 32) -> (n_pad, 8) -> slice real rows / lanes.
    return out.reshape(n_pad, OUT_PAD)[:N, :OUT_DIM].reshape(B, S, OUT_DIM)


def init_params(key):
    """Deterministic synthetic parameters matching the nn.Sequential shapes.
    PyTorch stores Linear weight as (out, in); we pre-transpose to (in, out) and
    split the first layer's input into the [distances | label_counts] halves."""
    k1, k2, k3, k4 = jax.random.split(key, 4)
    # first Linear: (2*max_k -> hid), xavier_normal_ with gain=0.01 -> tiny normal
    w1 = 0.01 * jax.random.normal(k1, (2 * MAX_K, HID), jnp.float32)
    b1 = jax.random.uniform(k2, (1, HID), jnp.float32, -0.1, 0.1)
    # second Linear: (hid -> 2 + log2(max_k))
    w2 = jax.random.normal(k3, (HID, OUT_DIM), jnp.float32) / math.sqrt(HID)
    b2 = jax.random.uniform(k4, (1, OUT_DIM), jnp.float32, -0.1, 0.1)
    return (w1[:MAX_K], w1[MAX_K:], b1, w2, b2)


def reference(distances, values, params):
    """Pure-JAX reference implementing the PyTorch semantics."""
    w1d, w1c, b1, w2, b2 = params
    v = values.astype(jnp.int32)
    K = v.shape[-1]
    eq = v[..., :, None] == v[..., None, :]
    j = jnp.arange(K)[:, None]
    m = jnp.arange(K)[None, :]
    seen = jnp.any(eq & (m < j), axis=-1)
    first = ((v != 0) & ~seen).astype(jnp.float32)
    counts = jnp.cumsum(first, axis=-1)               # == _get_label_count_segment
    h = jnp.tanh(distances @ w1d + counts @ w1c + b1[0])
    logits = h @ w2 + b2[0]
    return jax.nn.softmax(logits, axis=-1)


if __name__ == "__main__":
    key = jax.random.PRNGKey(0)
    kp, kd, kv, kd2, kv2 = jax.random.split(key, 5)
    params = init_params(kp)

    # Small smoke test (exercises row padding).
    B, S = 2, 8
    distances = jax.random.uniform(kd, (B, S, MAX_K), jnp.float32, 0.0, 100.0)
    values = jax.random.randint(kv, (B, S, MAX_K), 0, 20, jnp.int32)
    out = jax.block_until_ready(meta_k_network(distances, values, params))
    ref = reference(distances, values, params)
    assert out.shape == (B, S, OUT_DIM)
    assert bool(jnp.allclose(out, ref, atol=1e-5, rtol=1e-5)), "mismatch vs reference (small)"

    # Slightly larger test (exercises multiple grid steps and the chunk loop).
    B2, S2 = 8, 192
    distances2 = jax.random.uniform(kd2, (B2, S2, MAX_K), jnp.float32, 0.0, 100.0)
    values2 = jax.random.randint(kv2, (B2, S2, MAX_K), 0, 50, jnp.int32)
    out2 = jax.block_until_ready(meta_k_network(distances2, values2, params))
    ref2 = reference(distances2, values2, params)
    assert out2.shape == (B2, S2, OUT_DIM)
    assert bool(jnp.allclose(out2, ref2, atol=1e-5, rtol=1e-5)), "mismatch vs reference (large)"

    print("KERNEL_OK")
</pallas_src>

<mosaic_0001>
module attributes {stable_mosaic.version = 11 : i64} {
  func.func @meta_k_kernel(%arg0: i32, %arg1: memref<8x128xf32, #tpu.memory_space<vmem>>, %arg2: memref<8x128xi32, #tpu.memory_space<vmem>>, %arg3: memref<128x128xf32, #tpu.memory_space<vmem>>, %arg4: memref<128x128xf32, #tpu.memory_space<vmem>>, %arg5: memref<1x128xf32, #tpu.memory_space<vmem>>, %arg6: memref<128x32xf32, #tpu.memory_space<vmem>>, %arg7: memref<1x32xf32, #tpu.memory_space<vmem>>, %arg8: memref<32x32xf32, #tpu.memory_space<vmem>>, %arg9: memref<8x32xf32, #tpu.memory_space<vmem>>) attributes {dimension_semantics = [#tpu.dimension_semantics<parallel>], iteration_bounds = array<i64: 1>, scalar_prefetch = 0 : i64, scratch_operands = 0 : i64, tpu.core_type = #tpu.core_type<tc>, window_params = [{transform_indices = @transform_0, window_bounds = array<i64: 8, 128>}, {transform_indices = @transform_1, window_bounds = array<i64: 8, 128>}, {pipeline_mode = #tpu.pipeline_mode<synchronous>, transform_indices = @transform_2, window_bounds = array<i64: 128, 128>}, {pipeline_mode = #tpu.pipeline_mode<synchronous>, transform_indices = @transform_3, window_bounds = array<i64: 128, 128>}, {pipeline_mode = #tpu.pipeline_mode<synchronous>, transform_indices = @transform_4, window_bounds = array<i64: 1, 128>}, {pipeline_mode = #tpu.pipeline_mode<synchronous>, transform_indices = @transform_5, window_bounds = array<i64: 128, 32>}, {pipeline_mode = #tpu.pipeline_mode<synchronous>, transform_indices = @transform_6, window_bounds = array<i64: 1, 32>}, {pipeline_mode = #tpu.pipeline_mode<synchronous>, transform_indices = @transform_7, window_bounds = array<i64: 32, 32>}, {transform_indices = @transform_8, window_bounds = array<i64: 8, 32>}]} {
    %c0_i32 = arith.constant 0 : i32
    %c8_i32 = arith.constant 8 : i32
    %0 = arith.muli %c0_i32, %c8_i32 : i32
    %1 = tpu.assume_multiple %0, 8 : i32
    %2 = arith.index_cast %1 : i32 to index
    %c0 = arith.constant 0 : index
    %3 = vector.load %arg2[%2, %c0] : memref<8x128xi32, #tpu.memory_space<vmem>>, vector<8x128xi32>
    %4 = arith.index_cast %1 : i32 to index
    %c0_0 = arith.constant 0 : index
    %5 = vector.load %arg1[%4, %c0_0] : memref<8x128xf32, #tpu.memory_space<vmem>>, vector<8x128xf32>
    %6 = tpu.iota {dimensions = array<i32: 1>} : vector<8x128xi32>
    %c31_i32 = arith.constant 31 : i32
    %7 = vector.broadcast %c31_i32 : i32 to vector<8x128xi32>
    %8 = arith.andi %6, %7 : vector<8x128xi32>
    %c0_i32_1 = arith.constant 0 : i32
    %9 = vector.broadcast %c0_i32_1 : i32 to vector<8x128xi32>
    %10 = arith.cmpi slt, %8, %9 : vector<8x128xi32>
    %c1_i32 = arith.constant 1 : i32
    %11 = tpu.dynamic_rotate %3 by %c1_i32 dim 1 : vector<8x128xi32>, i32 -> vector<8x128xi32>
    %12 = arith.cmpi eq, %3, %11 : vector<8x128xi32>
    %c1_i32_2 = arith.constant 1 : i32
    %13 = vector.broadcast %c1_i32_2 : i32 to vector<8x128xi32>
    %14 = arith.cmpi sge, %8, %13 : vector<8x128xi32>
    %15 = arith.andi %12, %14 : vector<8x128xi1>
    %16 = arith.ori %10, %15 : vector<8x128xi1>
    %c2_i32 = arith.constant 2 : i32
    %17 = tpu.dynamic_rotate %3 by %c2_i32 dim 1 : vector<8x128xi32>, i32 -> vector<8x128xi32>
    %18 = arith.cmpi eq, %3, %17 : vector<8x128xi32>
    %c2_i32_3 = arith.constant 2 : i32
    %19 = vector.broadcast %c2_i32_3 : i32 to vector<8x128xi32>
    %20 = arith.cmpi sge, %8, %19 : vector<8x128xi32>
    %21 = arith.andi %18, %20 : vector<8x128xi1>
    %22 = arith.ori %16, %21 : vector<8x128xi1>
    %c3_i32 = arith.constant 3 : i32
    %23 = tpu.dynamic_rotate %3 by %c3_i32 dim 1 : vector<8x128xi32>, i32 -> vector<8x128xi32>
    %24 = arith.cmpi eq, %3, %23 : vector<8x128xi32>
    %c3_i32_4 = arith.constant 3 : i32
    %25 = vector.broadcast %c3_i32_4 : i32 to vector<8x128xi32>
    %26 = arith.cmpi sge, %8, %25 : vector<8x128xi32>
    %27 = arith.andi %24, %26 : vector<8x128xi1>
    %28 = arith.ori %22, %27 : vector<8x128xi1>
    %c4_i32 = arith.constant 4 : i32
    %29 = tpu.dynamic_rotate %3 by %c4_i32 dim 1 : vector<8x128xi32>, i32 -> vector<8x128xi32>
    %30 = arith.cmpi eq, %3, %29 : vector<8x128xi32>
    %c4_i32_5 = arith.constant 4 : i32
    %31 = vector.broadcast %c4_i32_5 : i32 to vector<8x128xi32>
    %32 = arith.cmpi sge, %8, %31 : vector<8x128xi32>
    %33 = arith.andi %30, %32 : vector<8x128xi1>
    %34 = arith.ori %28, %33 : vector<8x128xi1>
    %c5_i32 = arith.constant 5 : i32
    %35 = tpu.dynamic_rotate %3 by %c5_i32 dim 1 : vector<8x128xi32>, i32 -> vector<8x128xi32>
    %36 = arith.cmpi eq, %3, %35 : vector<8x128xi32>
    %c5_i32_6 = arith.constant 5 : i32
    %37 = vector.broadcast %c5_i32_6 : i32 to vector<8x128xi32>
    %38 = arith.cmpi sge, %8, %37 : vector<8x128xi32>
    %39 = arith.andi %36, %38 : vector<8x128xi1>
    %40 = arith.ori %34, %39 : vector<8x128xi1>
    %c6_i32 = arith.constant 6 : i32
    %41 = tpu.dynamic_rotate %3 by %c6_i32 dim 1 : vector<8x128xi32>, i32 -> vector<8x128xi32>
    %42 = arith.cmpi eq, %3, %41 : vector<8x128xi32>
    %c6_i32_7 = arith.constant 6 : i32
    %43 = vector.broadcast %c6_i32_7 : i32 to vector<8x128xi32>
    %44 = arith.cmpi sge, %8, %43 : vector<8x128xi32>
    %45 = arith.andi %42, %44 : vector<8x128xi1>
    %46 = arith.ori %40, %45 : vector<8x128xi1>
    %c7_i32 = arith.constant 7 : i32
    %47 = tpu.dynamic_rotate %3 by %c7_i32 dim 1 : vector<8x128xi32>, i32 -> vector<8x128xi32>
    %48 = arith.cmpi eq, %3, %47 : vector<8x128xi32>
    %c7_i32_8 = arith.constant 7 : i32
    %49 = vector.broadcast %c7_i32_8 : i32 to vector<8x128xi32>
    %50 = arith.cmpi sge, %8, %49 : vector<8x128xi32>
    %51 = arith.andi %48, %50 : vector<8x128xi1>
    %52 = arith.ori %46, %51 : vector<8x128xi1>
    %c8_i32_9 = arith.constant 8 : i32
    %53 = tpu.dynamic_rotate %3 by %c8_i32_9 dim 1 : vector<8x128xi32>, i32 -> vector<8x128xi32>
    %54 = arith.cmpi eq, %3, %53 : vector<8x128xi32>
    %c8_i32_10 = arith.constant 8 : i32
    %55 = vector.broadcast %c8_i32_10 : i32 to vector<8x128xi32>
    %56 = arith.cmpi sge, %8, %55 : vector<8x128xi32>
    %57 = arith.andi %54, %56 : vector<8x128xi1>
    %58 = arith.ori %52, %57 : vector<8x128xi1>
    %c9_i32 = arith.constant 9 : i32
    %59 = tpu.dynamic_rotate %3 by %c9_i32 dim 1 : vector<8x128xi32>, i32 -> vector<8x128xi32>
    %60 = arith.cmpi eq, %3, %59 : vector<8x128xi32>
    %c9_i32_11 = arith.constant 9 : i32
    %61 = vector.broadcast %c9_i32_11 : i32 to vector<8x128xi32>
    %62 = arith.cmpi sge, %8, %61 : vector<8x128xi32>
    %63 = arith.andi %60, %62 : vector<8x128xi1>
    %64 = arith.ori %58, %63 : vector<8x128xi1>
    %c10_i32 = arith.constant 10 : i32
    %65 = tpu.dynamic_rotate %3 by %c10_i32 dim 1 : vector<8x128xi32>, i32 -> vector<8x128xi32>
    %66 = arith.cmpi eq, %3, %65 : vector<8x128xi32>
    %c10_i32_12 = arith.constant 10 : i32
    %67 = vector.broadcast %c10_i32_12 : i32 to vector<8x128xi32>
    %68 = arith.cmpi sge, %8, %67 : vector<8x128xi32>
    %69 = arith.andi %66, %68 : vector<8x128xi1>
    %70 = arith.ori %64, %69 : vector<8x128xi1>
    %c11_i32 = arith.constant 11 : i32
    %71 = tpu.dynamic_rotate %3 by %c11_i32 dim 1 : vector<8x128xi32>, i32 -> vector<8x128xi32>
    %72 = arith.cmpi eq, %3, %71 : vector<8x128xi32>
    %c11_i32_13 = arith.constant 11 : i32
    %73 = vector.broadcast %c11_i32_13 : i32 to vector<8x128xi32>
    %74 = arith.cmpi sge, %8, %73 : vector<8x128xi32>
    %75 = arith.andi %72, %74 : vector<8x128xi1>
    %76 = arith.ori %70, %75 : vector<8x128xi1>
    %c12_i32 = arith.constant 12 : i32
    %77 = tpu.dynamic_rotate %3 by %c12_i32 dim 1 : vector<8x128xi32>, i32 -> vector<8x128xi32>
    %78 = arith.cmpi eq, %3, %77 : vector<8x128xi32>
    %c12_i32_14 = arith.constant 12 : i32
    %79 = vector.broadcast %c12_i32_14 : i32 to vector<8x128xi32>
    %80 = arith.cmpi sge, %8, %79 : vector<8x128xi32>
    %81 = arith.andi %78, %80 : vector<8x128xi1>
    %82 = arith.ori %76, %81 : vector<8x128xi1>
    %c13_i32 = arith.constant 13 : i32
    %83 = tpu.dynamic_rotate %3 by %c13_i32 dim 1 : vector<8x128xi32>, i32 -> vector<8x128xi32>
    %84 = arith.cmpi eq, %3, %83 : vector<8x128xi32>
    %c13_i32_15 = arith.constant 13 : i32
    %85 = vector.broadcast %c13_i32_15 : i32 to vector<8x128xi32>
    %86 = arith.cmpi sge, %8, %85 : vector<8x128xi32>
    %87 = arith.andi %84, %86 : vector<8x128xi1>
    %88 = arith.ori %82, %87 : vector<8x128xi1>
    %c14_i32 = arith.constant 14 : i32
    %89 = tpu.dynamic_rotate %3 by %c14_i32 dim 1 : vector<8x128xi32>, i32 -> vector<8x128xi32>
    %90 = arith.cmpi eq, %3, %89 : vector<8x128xi32>
    %c14_i32_16 = arith.constant 14 : i32
    %91 = vector.broadcast %c14_i32_16 : i32 to vector<8x128xi32>
    %92 = arith.cmpi sge, %8, %91 : vector<8x128xi32>
    %93 = arith.andi %90, %92 : vector<8x128xi1>
    %94 = arith.ori %88, %93 : vector<8x128xi1>
    %c15_i32 = arith.constant 15 : i32
    %95 = tpu.dynamic_rotate %3 by %c15_i32 dim 1 : vector<8x128xi32>, i32 -> vector<8x128xi32>
    %96 = arith.cmpi eq, %3, %95 : vector<8x128xi32>
    %c15_i32_17 = arith.constant 15 : i32
    %97 = vector.broadcast %c15_i32_17 : i32 to vector<8x128xi32>
    %98 = arith.cmpi sge, %8, %97 : vector<8x128xi32>
    %99 = arith.andi %96, %98 : vector<8x128xi1>
    %100 = arith.ori %94, %99 : vector<8x128xi1>
    %c16_i32 = arith.constant 16 : i32
    %101 = tpu.dynamic_rotate %3 by %c16_i32 dim 1 : vector<8x128xi32>, i32 -> vector<8x128xi32>
    %102 = arith.cmpi eq, %3, %101 : vector<8x128xi32>
    %c16_i32_18 = arith.constant 16 : i32
    %103 = vector.broadcast %c16_i32_18 : i32 to vector<8x128xi32>
    %104 = arith.cmpi sge, %8, %103 : vector<8x128xi32>
    %105 = arith.andi %102, %104 : vector<8x128xi1>
    %106 = arith.ori %100, %105 : vector<8x128xi1>
    %c17_i32 = arith.constant 17 : i32
    %107 = tpu.dynamic_rotate %3 by %c17_i32 dim 1 : vector<8x128xi32>, i32 -> vector<8x128xi32>
    %108 = arith.cmpi eq, %3, %107 : vector<8x128xi32>
    %c17_i32_19 = arith.constant 17 : i32
    %109 = vector.broadcast %c17_i32_19 : i32 to vector<8x128xi32>
    %110 = arith.cmpi sge, %8, %109 : vector<8x128xi32>
    %111 = arith.andi %108, %110 : vector<8x128xi1>
    %112 = arith.ori %106, %111 : vector<8x128xi1>
    %c18_i32 = arith.constant 18 : i32
    %113 = tpu.dynamic_rotate %3 by %c18_i32 dim 1 : vector<8x128xi32>, i32 -> vector<8x128xi32>
    %114 = arith.cmpi eq, %3, %113 : vector<8x128xi32>
    %c18_i32_20 = arith.constant 18 : i32
    %115 = vector.broadcast %c18_i32_20 : i32 to vector<8x128xi32>
    %116 = arith.cmpi sge, %8, %115 : vector<8x128xi32>
    %117 = arith.andi %114, %116 : vector<8x128xi1>
    %118 = arith.ori %112, %117 : vector<8x128xi1>
    %c19_i32 = arith.constant 19 : i32
    %119 = tpu.dynamic_rotate %3 by %c19_i32 dim 1 : vector<8x128xi32>, i32 -> vector<8x128xi32>
    %120 = arith.cmpi eq, %3, %119 : vector<8x128xi32>
    %c19_i32_21 = arith.constant 19 : i32
    %121 = vector.broadcast %c19_i32_21 : i32 to vector<8x128xi32>
    %122 = arith.cmpi sge, %8, %121 : vector<8x128xi32>
    %123 = arith.andi %120, %122 : vector<8x128xi1>
    %124 = arith.ori %118, %123 : vector<8x128xi1>
    %c20_i32 = arith.constant 20 : i32
    %125 = tpu.dynamic_rotate %3 by %c20_i32 dim 1 : vector<8x128xi32>, i32 -> vector<8x128xi32>
    %126 = arith.cmpi eq, %3, %125 : vector<8x128xi32>
    %c20_i32_22 = arith.constant 20 : i32
    %127 = vector.broadcast %c20_i32_22 : i32 to vector<8x128xi32>
    %128 = arith.cmpi sge, %8, %127 : vector<8x128xi32>
    %129 = arith.andi %126, %128 : vector<8x128xi1>
    %130 = arith.ori %124, %129 : vector<8x128xi1>
    %c21_i32 = arith.constant 21 : i32
    %131 = tpu.dynamic_rotate %3 by %c21_i32 dim 1 : vector<8x128xi32>, i32 -> vector<8x128xi32>
    %132 = arith.cmpi eq, %3, %131 : vector<8x128xi32>
    %c21_i32_23 = arith.constant 21 : i32
    %133 = vector.broadcast %c21_i32_23 : i32 to vector<8x128xi32>
    %134 = arith.cmpi sge, %8, %133 : vector<8x128xi32>
    %135 = arith.andi %132, %134 : vector<8x128xi1>
    %136 = arith.ori %130, %135 : vector<8x128xi1>
    %c22_i32 = arith.constant 22 : i32
    %137 = tpu.dynamic_rotate %3 by %c22_i32 dim 1 : vector<8x128xi32>, i32 -> vector<8x128xi32>
    %138 = arith.cmpi eq, %3, %137 : vector<8x128xi32>
    %c22_i32_24 = arith.constant 22 : i32
    %139 = vector.broadcast %c22_i32_24 : i32 to vector<8x128xi32>
    %140 = arith.cmpi sge, %8, %139 : vector<8x128xi32>
    %141 = arith.andi %138, %140 : vector<8x128xi1>
    %142 = arith.ori %136, %141 : vector<8x128xi1>
    %c23_i32 = arith.constant 23 : i32
    %143 = tpu.dynamic_rotate %3 by %c23_i32 dim 1 : vector<8x128xi32>, i32 -> vector<8x128xi32>
    %144 = arith.cmpi eq, %3, %143 : vector<8x128xi32>
    %c23_i32_25 = arith.constant 23 : i32
    %145 = vector.broadcast %c23_i32_25 : i32 to vector<8x128xi32>
    %146 = arith.cmpi sge, %8, %145 : vector<8x128xi32>
    %147 = arith.andi %144, %146 : vector<8x128xi1>
    %148 = arith.ori %142, %147 : vector<8x128xi1>
    %c24_i32 = arith.constant 24 : i32
    %149 = tpu.dynamic_rotate %3 by %c24_i32 dim 1 : vector<8x128xi32>, i32 -> vector<8x128xi32>
    %150 = arith.cmpi eq, %3, %149 : vector<8x128xi32>
    %c24_i32_26 = arith.constant 24 : i32
    %151 = vector.broadcast %c24_i32_26 : i32 to vector<8x128xi32>
    %152 = arith.cmpi sge, %8, %151 : vector<8x128xi32>
    %153 = arith.andi %150, %152 : vector<8x128xi1>
    %154 = arith.ori %148, %153 : vector<8x128xi1>
    %c25_i32 = arith.constant 25 : i32
    %155 = tpu.dynamic_rotate %3 by %c25_i32 dim 1 : vector<8x128xi32>, i32 -> vector<8x128xi32>
    %156 = arith.cmpi eq, %3, %155 : vector<8x128xi32>
    %c25_i32_27 = arith.constant 25 : i32
    %157 = vector.broadcast %c25_i32_27 : i32 to vector<8x128xi32>
    %158 = arith.cmpi sge, %8, %157 : vector<8x128xi32>
    %159 = arith.andi %156, %158 : vector<8x128xi1>
    %160 = arith.ori %154, %159 : vector<8x128xi1>
    %c26_i32 = arith.constant 26 : i32
    %161 = tpu.dynamic_rotate %3 by %c26_i32 dim 1 : vector<8x128xi32>, i32 -> vector<8x128xi32>
    %162 = arith.cmpi eq, %3, %161 : vector<8x128xi32>
    %c26_i32_28 = arith.constant 26 : i32
    %163 = vector.broadcast %c26_i32_28 : i32 to vector<8x128xi32>
    %164 = arith.cmpi sge, %8, %163 : vector<8x128xi32>
    %165 = arith.andi %162, %164 : vector<8x128xi1>
    %166 = arith.ori %160, %165 : vector<8x128xi1>
    %c27_i32 = arith.constant 27 : i32
    %167 = tpu.dynamic_rotate %3 by %c27_i32 dim 1 : vector<8x128xi32>, i32 -> vector<8x128xi32>
    %168 = arith.cmpi eq, %3, %167 : vector<8x128xi32>
    %c27_i32_29 = arith.constant 27 : i32
    %169 = vector.broadcast %c27_i32_29 : i32 to vector<8x128xi32>
    %170 = arith.cmpi sge, %8, %169 : vector<8x128xi32>
    %171 = arith.andi %168, %170 : vector<8x128xi1>
    %172 = arith.ori %166, %171 : vector<8x128xi1>
    %c28_i32 = arith.constant 28 : i32
    %173 = tpu.dynamic_rotate %3 by %c28_i32 dim 1 : vector<8x128xi32>, i32 -> vector<8x128xi32>
    %174 = arith.cmpi eq, %3, %173 : vector<8x128xi32>
    %c28_i32_30 = arith.constant 28 : i32
    %175 = vector.broadcast %c28_i32_30 : i32 to vector<8x128xi32>
    %176 = arith.cmpi sge, %8, %175 : vector<8x128xi32>
    %177 = arith.andi %174, %176 : vector<8x128xi1>
    %178 = arith.ori %172, %177 : vector<8x128xi1>
    %c29_i32 = arith.constant 29 : i32
    %179 = tpu.dynamic_rotate %3 by %c29_i32 dim 1 : vector<8x128xi32>, i32 -> vector<8x128xi32>
    %180 = arith.cmpi eq, %3, %179 : vector<8x128xi32>
    %c29_i32_31 = arith.constant 29 : i32
    %181 = vector.broadcast %c29_i32_31 : i32 to vector<8x128xi32>
    %182 = arith.cmpi sge, %8, %181 : vector<8x128xi32>
    %183 = arith.andi %180, %182 : vector<8x128xi1>
    %184 = arith.ori %178, %183 : vector<8x128xi1>
    %c30_i32 = arith.constant 30 : i32
    %185 = tpu.dynamic_rotate %3 by %c30_i32 dim 1 : vector<8x128xi32>, i32 -> vector<8x128xi32>
    %186 = arith.cmpi eq, %3, %185 : vector<8x128xi32>
    %c30_i32_32 = arith.constant 30 : i32
    %187 = vector.broadcast %c30_i32_32 : i32 to vector<8x128xi32>
    %188 = arith.cmpi sge, %8, %187 : vector<8x128xi32>
    %189 = arith.andi %186, %188 : vector<8x128xi1>
    %190 = arith.ori %184, %189 : vector<8x128xi1>
    %c31_i32_33 = arith.constant 31 : i32
    %191 = tpu.dynamic_rotate %3 by %c31_i32_33 dim 1 : vector<8x128xi32>, i32 -> vector<8x128xi32>
    %192 = arith.cmpi eq, %3, %191 : vector<8x128xi32>
    %c31_i32_34 = arith.constant 31 : i32
    %193 = vector.broadcast %c31_i32_34 : i32 to vector<8x128xi32>
    %194 = arith.cmpi sge, %8, %193 : vector<8x128xi32>
    %195 = arith.andi %192, %194 : vector<8x128xi1>
    %196 = arith.ori %190, %195 : vector<8x128xi1>
    %c0_i32_35 = arith.constant 0 : i32
    %197 = vector.broadcast %c0_i32_35 : i32 to vector<8x128xi32>
    %198 = arith.cmpi ne, %3, %197 : vector<8x128xi32>
    %cst = arith.constant dense<true> : vector<8x128xi1>
    %199 = arith.xori %196, %cst : vector<8x128xi1>
    %200 = arith.andi %198, %199 : vector<8x128xi1>
    %cst_36 = arith.constant 1.000000e+00 : f32
    %cst_37 = arith.constant 0.000000e+00 : f32
    %201 = vector.broadcast %cst_36 : f32 to vector<8x128xf32>
    %202 = vector.broadcast %cst_37 : f32 to vector<8x128xf32>
    %203 = arith.select %200, %201, %202 : vector<8x128xi1>, vector<8x128xf32>
    %c0_38 = arith.constant 0 : index
    %c0_39 = arith.constant 0 : index
    %204 = vector.load %arg3[%c0_38, %c0_39] : memref<128x128xf32, #tpu.memory_space<vmem>>, vector<128x128xf32>
    %cst_40 = arith.constant dense<0.000000e+00> : vector<8x128xf32>
    %205 = tpu.matmul %5, %204, %cst_40 {dimension_numbers = #tpu.dot_dimension_numbers<[1], [0], [0], [1], [0, 0, 1, 1], [], []>} : vector<8x128xf32>, vector<128x128xf32>, vector<8x128xf32> -> vector<8x128xf32>
    %c0_41 = arith.constant 0 : index
    %c0_42 = arith.constant 0 : index
    %206 = vector.load %arg4[%c0_41, %c0_42] : memref<128x128xf32, #tpu.memory_space<vmem>>, vector<128x128xf32>
    %cst_43 = arith.constant dense<0.000000e+00> : vector<8x128xf32>
    %207 = tpu.matmul %203, %206, %cst_43 {dimension_numbers = #tpu.dot_dimension_numbers<[1], [0], [0], [1], [0, 0, 1, 1], [], []>} : vector<8x128xf32>, vector<128x128xf32>, vector<8x128xf32> -> vector<8x128xf32>
    %208 = arith.addf %205, %207 : vector<8x128xf32>
    %c0_44 = arith.constant 0 : index
    %c0_45 = arith.constant 0 : index
    %209 = vector.load %arg5[%c0_44, %c0_45] : memref<1x128xf32, #tpu.memory_space<vmem>>, vector<1x128xf32>
    %210 = vector.broadcast %209 : vector<1x128xf32> to vector<8x128xf32>
    %211 = arith.addf %208, %210 : vector<8x128xf32>
    %212 = math.tanh %211 : vector<8x128xf32>
    %c0_46 = arith.constant 0 : index
    %c0_47 = arith.constant 0 : index
    %213 = vector.load %arg6[%c0_46, %c0_47] : memref<128x32xf32, #tpu.memory_space<vmem>>, vector<128x32xf32>
    %cst_48 = arith.constant dense<0.000000e+00> : vector<8x32xf32>
    %214 = tpu.matmul %212, %213, %cst_48 {dimension_numbers = #tpu.dot_dimension_numbers<[1], [0], [0], [1], [0, 0, 1, 1], [], []>} : vector<8x128xf32>, vector<128x32xf32>, vector<8x32xf32> -> vector<8x32xf32>
    %c0_49 = arith.constant 0 : index
    %c0_50 = arith.constant 0 : index
    %215 = vector.load %arg7[%c0_49, %c0_50] : memref<1x32xf32, #tpu.memory_space<vmem>>, vector<1x32xf32>
    %216 = vector.broadcast %215 : vector<1x32xf32> to vector<8x32xf32>
    %217 = arith.addf %214, %216 : vector<8x32xf32>
    %cst_51 = arith.constant dense<0xFF800000> : vector<8xf32>
    %218 = vector.multi_reduction <maximumf>, %217, %cst_51 [1] : vector<8x32xf32> to vector<8xf32>
    %219 = vector.shape_cast %218 : vector<8xf32> to vector<8x1xf32>
    %220 = vector.broadcast %219 : vector<8x1xf32> to vector<8x32xf32>
    %221 = arith.subf %217, %220 : vector<8x32xf32>
    %222 = math.exp %221 : vector<8x32xf32>
    %c0_52 = arith.constant 0 : index
    %c0_53 = arith.constant 0 : index
    %223 = vector.load %arg8[%c0_52, %c0_53] : memref<32x32xf32, #tpu.memory_space<vmem>>, vector<32x32xf32>
    %cst_54 = arith.constant dense<0.000000e+00> : vector<8x32xf32>
    %224 = tpu.matmul %222, %223, %cst_54 {dimension_numbers = #tpu.dot_dimension_numbers<[1], [0], [0], [1], [0, 0, 1, 1], [], []>} : vector<8x32xf32>, vector<32x32xf32>, vector<8x32xf32> -> vector<8x32xf32>
    %225 = arith.divf %222, %224 : vector<8x32xf32>
    %226 = arith.index_cast %1 : i32 to index
    %c0_55 = arith.constant 0 : index
    %227 = vector.load %arg9[%226, %c0_55] : memref<8x32xf32, #tpu.memory_space<vmem>>, vector<8x32xf32>
    tpu.vector_store %arg9[%226, %c0_55], %225 {strides = array<i32>} : memref<8x32xf32, #tpu.memory_space<vmem>>, vector<8x32xf32>,
    %c1_i32_56 = arith.constant 1 : i32
    return
  }
  func.func @transform_0(%arg0: i32) -> (i32, i32) {
    %c0_i32 = arith.constant 0 : i32
    %c0_i32_0 = arith.constant 0 : i32
    return %arg0, %c0_i32 : i32, i32
  }
  func.func @transform_1(%arg0: i32) -> (i32, i32) {
    %c0_i32 = arith.constant 0 : i32
    %c0_i32_0 = arith.constant 0 : i32
    return %arg0, %c0_i32 : i32, i32
  }
  func.func @transform_2(%arg0: i32) -> (i32, i32) {
    %c0_i32 = arith.constant 0 : i32
    %c0_i32_0 = arith.constant 0 : i32
    %c0_i32_1 = arith.constant 0 : i32
    return %c0_i32, %c0_i32_0 : i32, i32
  }
  func.func @transform_3(%arg0: i32) -> (i32, i32) {
    %c0_i32 = arith.constant 0 : i32
    %c0_i32_0 = arith.constant 0 : i32
    %c0_i32_1 = arith.constant 0 : i32
    return %c0_i32, %c0_i32_0 : i32, i32
  }
  func.func @transform_4(%arg0: i32) -> (i32, i32) {
    %c0_i32 = arith.constant 0 : i32
    %c0_i32_0 = arith.constant 0 : i32
    %c0_i32_1 = arith.constant 0 : i32
    return %c0_i32, %c0_i32_0 : i32, i32
  }
  func.func @transform_5(%arg0: i32) -> (i32, i32) {
    %c0_i32 = arith.constant 0 : i32
    %c0_i32_0 = arith.constant 0 : i32
    %c0_i32_1 = arith.constant 0 : i32
    return %c0_i32, %c0_i32_0 : i32, i32
  }
  func.func @transform_6(%arg0: i32) -> (i32, i32) {
    %c0_i32 = arith.constant 0 : i32
    %c0_i32_0 = arith.constant 0 : i32
    %c0_i32_1 = arith.constant 0 : i32
    return %c0_i32, %c0_i32_0 : i32, i32
  }
  func.func @transform_7(%arg0: i32) -> (i32, i32) {
    %c0_i32 = arith.constant 0 : i32
    %c0_i32_0 = arith.constant 0 : i32
    %c0_i32_1 = arith.constant 0 : i32
    return %c0_i32, %c0_i32_0 : i32, i32
  }
  func.func @transform_8(%arg0: i32) -> (i32, i32) {
    %c0_i32 = arith.constant 0 : i32
    %c0_i32_0 = arith.constant 0 : i32
    return %arg0, %c0_i32 : i32, i32
  }
}

</mosaic_0001>

<llo_original>
// kernel: tpu_custom_call.1
$region0: #{tpu_custom_call.1}
  #allocation0 [shape = 'u32[]', space=smem, size = 0x4, offset = 0x4, fixed_abs, tag = 'smem constant byte address 0x4 - core index']
  #allocation1 [shape = 'u32[72,128]{1,0:T(1,128)}', space=vmem, size = 0x9000, scoped, tag = 'internal scratch']
  %s0 = inlined_call_operand.hbm [shape: f32[8,128], index: 0, kind: input, shape index: {}]
  %s1 = inlined_call_operand.hbm [shape: s32[8,128], index: 1, kind: input, shape index: {}]
  %s2 = inlined_call_operand.vmem [shape: f32[128,128], index: 2, kind: input, shape index: {}]
  %s3 = inlined_call_operand.hbm [shape: f32[128,128], index: 3, kind: input, shape index: {}]
  %s4 = inlined_call_operand.vmem [shape: f32[1,128], index: 4, kind: input, shape index: {}]
  %s5 = inlined_call_operand.vmem [shape: f32[128,32], index: 5, kind: input, shape index: {}]
  %s6 = inlined_call_operand.vmem [shape: f32[1,32], index: 6, kind: input, shape index: {}]
  %s7 = inlined_call_operand.vmem [shape: f32[32,32], index: 7, kind: input, shape index: {}]
  %s8 = inlined_call_operand.hbm [shape: f32[8,32], index: 8, kind: output, shape index: {}]
  %s9 = sld [smem:[#allocation0]]
  $region54: #{tpu_custom_call.1} parent=0
    _
  %s11 = ssub.s32 1, %s9
  %s12 = scalar_select 0, %s11, %s9
  $region1: #{tpu_custom_call.1} parent=0
    #allocation2 [shape = 'u8[4096]{0}', space=vmem, size = 0x1000, scoped, tag = 'input window, operand 0, single buffered']
    #allocation3 [shape = 's32[1]{0}', space=sflag, size = 0x4, scoped, tag = 'scoped memory for tpu_custom_call.1']
    #allocation4 [shape = 's32[1]{0}', space=sflag, size = 0x4, scoped, tag = 'scoped memory for tpu_custom_call.1']
    #allocation5 [shape = 'u8[4096]{0}', space=vmem, size = 0x1000, scoped, tag = 'input window, operand 1, single buffered']
    #allocation6 [shape = 's32[1]{0}', space=sflag, size = 0x4, scoped, tag = 'scoped memory for tpu_custom_call.1']
    #allocation7 [shape = 'u8[65536]{0}', space=vmem, size = 0x10000, scoped, tag = 'input window, operand 3, single buffered']
    #allocation8 [shape = 'u8[4096]{0}', space=vmem, size = 0x1000, scoped, tag = 'output window, operand 0, single buffered']
    %13 = vsyncpa [#allocation3], 0
    %14 = vsyncpa [#allocation6], 0
    %15 = vsyncpa [#allocation4], 0
    // Predicated region
    $region2: #{tpu_custom_call.1} parent=1 // pred_check
      _
    $region3: #{tpu_custom_call.1} parent=1 // pred_check_branch
      %17 = sbr.rel (0) target = $region5
    $region4: #{tpu_custom_call.1} parent=1 // pred_region
      %19 = vsyncadd [#allocation3], 0
      %s21 = sshll.u32 %s0, 4
      %s22 = int_to_ptr.hbm [resolvable:$true] %s21
      %s23 = sshll.u32 [#allocation2], 4
      %s24 = int_to_ptr.vmem [resolvable:$true] %s23
      %26 = dma.hbm_to_vmem [thread:$0]  %s22, 128, %s24, [#allocation3]
    $region5: #{tpu_custom_call.1} parent=1 // pred_fallthru
      _
    // Predicated region
    $region6: #{tpu_custom_call.1} parent=1 // pred_check
      _
    $region7: #{tpu_custom_call.1} parent=1 // pred_check_branch
      %28 = sbr.rel (0) target = $region9
    $region8: #{tpu_custom_call.1} parent=1 // pred_region
      %30 = vsyncadd [#allocation6], 0
      %s32 = sshll.u32 %s1, 4
      %s33 = int_to_ptr.hbm [resolvable:$true] %s32
      %s34 = sshll.u32 [#allocation5], 4
      %s35 = int_to_ptr.vmem [resolvable:$true] %s34
      %37 = dma.hbm_to_vmem [thread:$0]  %s33, 128, %s35, [#allocation6]
    $region9: #{tpu_custom_call.1} parent=1 // pred_fallthru
      _
    // Predicated region
    $region10: #{tpu_custom_call.1} parent=1 // pred_check
      _
    $region11: #{tpu_custom_call.1} parent=1 // pred_check_branch
      %39 = sbr.rel (0) target = $region13
    $region12: #{tpu_custom_call.1} parent=1 // pred_region
      _
    $region13: #{tpu_custom_call.1} parent=1 // pred_fallthru
      _
    // Predicated region
    $region14: #{tpu_custom_call.1} parent=1 // pred_check
      _
    $region15: #{tpu_custom_call.1} parent=1 // pred_check_branch
      %41 = sbr.rel (0) target = $region17
    $region16: #{tpu_custom_call.1} parent=1 // pred_region
      %43 = vsyncadd [#allocation6], 0
      %s44 = sshll.u32 %s3, 4
      %s45 = int_to_ptr.hbm [resolvable:$true] %s44
      %s46 = sshll.u32 [#allocation7], 4
      %s47 = int_to_ptr.vmem [resolvable:$true] %s46
      %52 = dma.hbm_to_vmem [thread:$0]  %s45, 2048, %s47, [#allocation6], 128, 128, 8
    $region17: #{tpu_custom_call.1} parent=1 // pred_fallthru
      _
    // Predicated region
    $region18: #{tpu_custom_call.1} parent=1 // pred_check
      _
    $region19: #{tpu_custom_call.1} parent=1 // pred_check_branch
      %54 = sbr.rel (0) target = $region21
    $region20: #{tpu_custom_call.1} parent=1 // pred_region
      _
    $region21: #{tpu_custom_call.1} parent=1 // pred_fallthru
      _
    // Predicated region
    $region22: #{tpu_custom_call.1} parent=1 // pred_check
      _
    $region23: #{tpu_custom_call.1} parent=1 // pred_check_branch
      %56 = sbr.rel (0) target = $region25
    $region24: #{tpu_custom_call.1} parent=1 // pred_region
      _
    $region25: #{tpu_custom_call.1} parent=1 // pred_fallthru
      _
    // Predicated region
    $region26: #{tpu_custom_call.1} parent=1 // pred_check
      _
    $region27: #{tpu_custom_call.1} parent=1 // pred_check_branch
      %58 = sbr.rel (0) target = $region29
    $region28: #{tpu_custom_call.1} parent=1 // pred_region
      _
    $region29: #{tpu_custom_call.1} parent=1 // pred_fallthru
      _
    // Predicated region
    $region30: #{tpu_custom_call.1} parent=1 // pred_check
      _
    $region31: #{tpu_custom_call.1} parent=1 // pred_check_branch
      %60 = sbr.rel (0) target = $region33
    $region32: #{tpu_custom_call.1} parent=1 // pred_region
      _
    $region33: #{tpu_custom_call.1} parent=1 // pred_fallthru
      _
    // Predicated region
    $region34: #{tpu_custom_call.1} parent=1 // pred_check
      _
    $region35: #{tpu_custom_call.1} parent=1 // pred_check_branch
      %62 = sbr.rel (0) target = $region37
    $region36: #{tpu_custom_call.1} parent=1 // pred_region
      %64 = dma.done [#allocation3], 128
    $region37: #{tpu_custom_call.1} parent=1 // pred_fallthru
      _
    // Predicated region
    $region38: #{tpu_custom_call.1} parent=1 // pred_check
      _
    $region39: #{tpu_custom_call.1} parent=1 // pred_check_branch
      %66 = sbr.rel (0) target = $region41
    $region40: #{tpu_custom_call.1} parent=1 // pred_region
      %68 = dma.done [#allocation6], 128
    $region41: #{tpu_custom_call.1} parent=1 // pred_fallthru
      _
    // Predicated region
    $region42: #{tpu_custom_call.1} parent=1 // pred_check
      _
    $region43: #{tpu_custom_call.1} parent=1 // pred_check_branch
      %70 = sbr.rel (0) target = $region45
    $region44: #{tpu_custom_call.1} parent=1 // pred_region
      %72 = dma.done [#allocation6], 2048
    $region45: #{tpu_custom_call.1} parent=1 // pred_fallthru
      _
    %v73 = vld [vmem:[#allocation5] sm:$0xff]
    %v74 = vld [vmem:[#allocation2] sm:$0xff]
    %v75 = vlaneseq
    %v76 = vand.u32 %v75, 127
    %v77 = vand.u32 %v76, 31
    %vm78 = vcmp.lt.s32.totalorder %v77, 0
    %79 = vrot.lane.b32.xlu0 %v73, 1
    %v80 = vpop.permute.xlu0 %79
    %vm81 = vcmp.eq.s32.totalorder %v73, %v80
    %vm82 = vcmp.ge.s32.totalorder %v77, 1
    %vm83 = vmand %vm81, %vm82
    %vm84 = vmor %vm78, %vm83
    %85 = vrot.lane.b32.xlu0 %v73, 2
    %v86 = vpop.permute.xlu0 %85
    %vm87 = vcmp.eq.s32.totalorder %v73, %v86
    %vm88 = vcmp.ge.s32.totalorder %v77, 2
    %vm89 = vmand %vm87, %vm88
    %vm90 = vmor %vm84, %vm89
    %91 = vrot.lane.b32.xlu0 %v73, 3
    %v92 = vpop.permute.xlu0 %91
    %vm93 = vcmp.eq.s32.totalorder %v73, %v92
    %vm94 = vcmp.ge.s32.totalorder %v77, 3
    %vm95 = vmand %vm93, %vm94
    %vm96 = vmor %vm90, %vm95
    %97 = vrot.lane.b32.xlu0 %v73, 4
    %v98 = vpop.permute.xlu0 %97
    %vm99 = vcmp.eq.s32.totalorder %v73, %v98
    %vm100 = vcmp.ge.s32.totalorder %v77, 4
    %vm101 = vmand %vm99, %vm100
    %vm102 = vmor %vm96, %vm101
    %103 = vrot.lane.b32.xlu0 %v73, 5
    %v104 = vpop.permute.xlu0 %103
    %vm105 = vcmp.eq.s32.totalorder %v73, %v104
    %vm106 = vcmp.ge.s32.totalorder %v77, 5
    %vm107 = vmand %vm105, %vm106
    %vm108 = vmor %vm102, %vm107
    %109 = vrot.lane.b32.xlu0 %v73, 6
    %v110 = vpop.permute.xlu0 %109
    %vm111 = vcmp.eq.s32.totalorder %v73, %v110
    %vm112 = vcmp.ge.s32.totalorder %v77, 6
    %vm113 = vmand %vm111, %vm112
    %vm114 = vmor %vm108, %vm113
    %115 = vrot.lane.b32.xlu0 %v73, 7
    %v116 = vpop.permute.xlu0 %115
    %vm117 = vcmp.eq.s32.totalorder %v73, %v116
    %vm118 = vcmp.ge.s32.totalorder %v77, 7
    %vm119 = vmand %vm117, %vm118
    %vm120 = vmor %vm114, %vm119
    %121 = vrot.lane.b32.xlu0 %v73, 8
    %v122 = vpop.permute.xlu0 %121
    %vm123 = vcmp.eq.s32.totalorder %v73, %v122
    %vm124 = vcmp.ge.s32.totalorder %v77, 8
    %vm125 = vmand %vm123, %vm124
    %vm126 = vmor %vm120, %vm125
    %127 = vrot.lane.b32.xlu0 %v73, 9
    %v128 = vpop.permute.xlu0 %127
    %vm129 = vcmp.eq.s32.totalorder %v73, %v128
    %vm130 = vcmp.ge.s32.totalorder %v77, 9
    %vm131 = vmand %vm129, %vm130
    %vm132 = vmor %vm126, %vm131
    %133 = vrot.lane.b32.xlu0 %v73, 10
    %v134 = vpop.permute.xlu0 %133
    %vm135 = vcmp.eq.s32.totalorder %v73, %v134
    %vm136 = vcmp.ge.s32.totalorder %v77, 10
    %vm137 = vmand %vm135, %vm136
    %vm138 = vmor %vm132, %vm137
    %139 = vrot.lane.b32.xlu0 %v73, 11
    %v140 = vpop.permute.xlu0 %139
    %vm141 = vcmp.eq.s32.totalorder %v73, %v140
    %vm142 = vcmp.ge.s32.totalorder %v77, 11
    %vm143 = vmand %vm141, %vm142
    %vm144 = vmor %vm138, %vm143
    %145 = vrot.lane.b32.xlu0 %v73, 12
    %v146 = vpop.permute.xlu0 %145
    %vm147 = vcmp.eq.s32.totalorder %v73, %v146
    %vm148 = vcmp.ge.s32.totalorder %v77, 12
    %vm149 = vmand %vm147, %vm148
    %vm150 = vmor %vm144, %vm149
    %151 = vrot.lane.b32.xlu0 %v73, 13
    %v152 = vpop.permute.xlu0 %151
    %vm153 = vcmp.eq.s32.totalorder %v73, %v152
    %vm154 = vcmp.ge.s32.totalorder %v77, 13
    %vm155 = vmand %vm153, %vm154
    %vm156 = vmor %vm150, %vm155
    %157 = vrot.lane.b32.xlu0 %v73, 14
    %v158 = vpop.permute.xlu0 %157
    %vm159 = vcmp.eq.s32.totalorder %v73, %v158
    %vm160 = vcmp.ge.s32.totalorder %v77, 14
    %vm161 = vmand %vm159, %vm160
    %vm162 = vmor %vm156, %vm161
    %163 = vrot.lane.b32.xlu0 %v73, 15
    %v164 = vpop.permute.xlu0 %163
    %vm165 = vcmp.eq.s32.totalorder %v73, %v164
    %vm166 = vcmp.ge.s32.totalorder %v77, 15
    %vm167 = vmand %vm165, %vm166
    %vm168 = vmor %vm162, %vm167
    %169 = vrot.lane.b32.xlu0 %v73, 16
    %v170 = vpop.permute.xlu0 %169
    %vm171 = vcmp.eq.s32.totalorder %v73, %v170
    %vm172 = vcmp.ge.s32.totalorder %v77, 16
    %vm173 = vmand %vm171, %vm172
    %vm174 = vmor %vm168, %vm173
    %175 = vrot.lane.b32.xlu0 %v73, 17
    %v176 = vpop.permute.xlu0 %175
    %vm177 = vcmp.eq.s32.totalorder %v73, %v176
    %vm178 = vcmp.ge.s32.totalorder %v77, 17
    %vm179 = vmand %vm177, %vm178
    %vm180 = vmor %vm174, %vm179
    %181 = vrot.lane.b32.xlu0 %v73, 18
    %v182 = vpop.permute.xlu0 %181
    %vm183 = vcmp.eq.s32.totalorder %v73, %v182
    %vm184 = vcmp.ge.s32.totalorder %v77, 18
    %vm185 = vmand %vm183, %vm184
    %vm186 = vmor %vm180, %vm185
    %187 = vrot.lane.b32.xlu0 %v73, 19
    %v188 = vpop.permute.xlu0 %187
    %vm189 = vcmp.eq.s32.totalorder %v73, %v188
    %vm190 = vcmp.ge.s32.totalorder %v77, 19
    %vm191 = vmand %vm189, %vm190
    %vm192 = vmor %vm186, %vm191
    %193 = vrot.lane.b32.xlu0 %v73, 20
    %v194 = vpop.permute.xlu0 %193
    %vm195 = vcmp.eq.s32.totalorder %v73, %v194
    %vm196 = vcmp.ge.s32.totalorder %v77, 20
    %vm197 = vmand %vm195, %vm196
    %vm198 = vmor %vm192, %vm197
    %199 = vrot.lane.b32.xlu0 %v73, 21
    %v200 = vpop.permute.xlu0 %199
    %vm201 = vcmp.eq.s32.totalorder %v73, %v200
    %vm202 = vcmp.ge.s32.totalorder %v77, 21
    %vm203 = vmand %vm201, %vm202
    %vm204 = vmor %vm198, %vm203
    %205 = vrot.lane.b32.xlu0 %v73, 22
    %v206 = vpop.permute.xlu0 %205
    %vm207 = vcmp.eq.s32.totalorder %v73, %v206
    %vm208 = vcmp.ge.s32.totalorder %v77, 22
    %vm209 = vmand %vm207, %vm208
    %vm210 = vmor %vm204, %vm209
    %211 = vrot.lane.b32.xlu0 %v73, 23
    %v212 = vpop.permute.xlu0 %211
    %vm213 = vcmp.eq.s32.totalorder %v73, %v212
    %vm214 = vcmp.ge.s32.totalorder %v77, 23
    %vm215 = vmand %vm213, %vm214
    %vm216 = vmor %vm210, %vm215
    %217 = vrot.lane.b32.xlu0 %v73, 24
    %v218 = vpop.permute.xlu0 %217
    %vm219 = vcmp.eq.s32.totalorder %v73, %v218
    %vm220 = vcmp.ge.s32.totalorder %v77, 24
    %vm221 = vmand %vm219, %vm220
    %vm222 = vmor %vm216, %vm221
    %223 = vrot.lane.b32.xlu0 %v73, 25
    %v224 = vpop.permute.xlu0 %223
    %vm225 = vcmp.eq.s32.totalorder %v73, %v224
    %vm226 = vcmp.ge.s32.totalorder %v77, 25
    %vm227 = vmand %vm225, %vm226
    %vm228 = vmor %vm222, %vm227
    %229 = vrot.lane.b32.xlu0 %v73, 26
    %v230 = vpop.permute.xlu0 %229
    %vm231 = vcmp.eq.s32.totalorder %v73, %v230
    %vm232 = vcmp.ge.s32.totalorder %v77, 26
    %vm233 = vmand %vm231, %vm232
    %vm234 = vmor %vm228, %vm233
    %235 = vrot.lane.b32.xlu0 %v73, 27
    %v236 = vpop.permute.xlu0 %235
    %vm237 = vcmp.eq.s32.totalorder %v73, %v236
    %vm238 = vcmp.ge.s32.totalorder %v77, 27
    %vm239 = vmand %vm237, %vm238
    %vm240 = vmor %vm234, %vm239
    %241 = vrot.lane.b32.xlu0 %v73, 28
    %v242 = vpop.permute.xlu0 %241
    %vm243 = vcmp.eq.s32.totalorder %v73, %v242
    %vm244 = vcmp.ge.s32.totalorder %v77, 28
    %vm245 = vmand %vm243, %vm244
    %vm246 = vmor %vm240, %vm245
    %247 = vrot.lane.b32.xlu0 %v73, 29
    %v248 = vpop.permute.xlu0 %247
    %vm249 = vcmp.eq.s32.totalorder %v73, %v248
    %vm250 = vcmp.ge.s32.totalorder %v77, 29
    %vm251 = vmand %vm249, %vm250
    %vm252 = vmor %vm246, %vm251
    %253 = vrot.lane.b32.xlu0 %v73, 30
    %v254 = vpop.permute.xlu0 %253
    %vm255 = vcmp.eq.s32.totalorder %v73, %v254
    %vm256 = vcmp.ge.s32.totalorder %v77, 30
    %vm257 = vmand %vm255, %vm256
    %vm258 = vmor %vm252, %vm257
    %259 = vrot.lane.b32.xlu0 %v73, 31
    %v260 = vpop.permute.xlu0 %259
    %vm261 = vcmp.eq.s32.totalorder %v73, %v260
    %vm262 = vcmp.ge.s32.totalorder %v77, 31
    %vm263 = vmand %vm261, %vm262
    %vm264 = vmor %vm258, %vm263
    %vm265 = vcmp.ne.s32.totalorder %v73, 0
    %vm266 = vmxor %vm264, 1
    %vm267 = vmand %vm265, %vm266
    %v268 = vsel %vm267, 1.0, 0.0
    %v269 = vld [vmem:[%s2] sm:$0xff]
    %v270 = vld [vmem:[%s2 + $0x8] sm:$0xff]
    %v271 = vld [vmem:[%s2 + $0x10] sm:$0xff]
    %v272 = vld [vmem:[%s2 + $0x18] sm:$0xff]
    %v273 = vld [vmem:[%s2 + $0x20] sm:$0xff]
    %v274 = vld [vmem:[%s2 + $0x28] sm:$0xff]
    %v275 = vld [vmem:[%s2 + $0x30] sm:$0xff]
    %v276 = vld [vmem:[%s2 + $0x38] sm:$0xff]
    %v277 = vld [vmem:[%s2 + $0x40] sm:$0xff]
    %v278 = vld [vmem:[%s2 + $0x48] sm:$0xff]
    %v279 = vld [vmem:[%s2 + $0x50] sm:$0xff]
    %v280 = vld [vmem:[%s2 + $0x58] sm:$0xff]
    %v281 = vld [vmem:[%s2 + $0x60] sm:$0xff]
    %v282 = vld [vmem:[%s2 + $0x68] sm:$0xff]
    %v283 = vld [vmem:[%s2 + $0x70] sm:$0xff]
    %v284 = vld [vmem:[%s2 + $0x78] sm:$0xff]
    %v285 = vld [vmem:[#allocation7] sm:$0xff]
    %v286 = vld [vmem:[#allocation7 + $0x8] sm:$0xff]
    %v287 = vld [vmem:[#allocation7 + $0x10] sm:$0xff]
    %v288 = vld [vmem:[#allocation7 + $0x18] sm:$0xff]
    %v289 = vld [vmem:[#allocation7 + $0x20] sm:$0xff]
    %v290 = vld [vmem:[#allocation7 + $0x28] sm:$0xff]
    %v291 = vld [vmem:[#allocation7 + $0x30] sm:$0xff]
    %v292 = vld [vmem:[#allocation7 + $0x38] sm:$0xff]
    %v293 = vld [vmem:[#allocation7 + $0x40] sm:$0xff]
    %v294 = vld [vmem:[#allocation7 + $0x48] sm:$0xff]
    %v295 = vld [vmem:[#allocation7 + $0x50] sm:$0xff]
    %v296 = vld [vmem:[#allocation7 + $0x58] sm:$0xff]
    %v297 = vld [vmem:[#allocation7 + $0x60] sm:$0xff]
    %v298 = vld [vmem:[#allocation7 + $0x68] sm:$0xff]
    %v299 = vld [vmem:[#allocation7 + $0x70] sm:$0xff]
    %v300 = vld [vmem:[#allocation7 + $0x78] sm:$0xff]
    %301 = vmatpush.msra.mxu0 %v300
    %302 = vmatpush.msra.mxu0 %v299
    %303 = vmatpush.msra.mxu0 %v298
    %304 = vmatpush.msra.mxu0 %v297
    %305 = vmatpush.msra.mxu0 %v296
    %306 = vmatpush.msra.mxu0 %v295
    %307 = vmatpush.msra.mxu0 %v294
    %308 = vmatpush.msra.mxu0 %v293
    %309 = vmatpush.msra.mxu0 %v292
    %310 = vmatpush.msra.mxu0 %v291
    %311 = vmatpush.msra.mxu0 %v290
    %312 = vmatpush.msra.mxu0 %v289
    %313 = vmatpush.msra.mxu0 %v288
    %314 = vmatpush.msra.mxu0 %v287
    %315 = vmatpush.msra.mxu0 %v286
    %316 = vmatpush.msra.mxu0 %v285
    %317 = vmatmul.f32.gmra.mxu0 %v268
    %v318 = vpop.f32.mrf.mxu0
    %v319 = vadd.f32 0.0, %v318
    %320 = vdwg.mxu0
    %321 = vmatpush.msra.mxu0 %v284
    %322 = vmatpush.msra.mxu0 %v283
    %323 = vmatpush.msra.mxu0 %v282
    %324 = vmatpush.msra.mxu0 %v281
    %325 = vmatpush.msra.mxu0 %v280
    %326 = vmatpush.msra.mxu0 %v279
    %327 = vmatpush.msra.mxu0 %v278
    %328 = vmatpush.msra.mxu0 %v277
    %329 = vmatpush.msra.mxu0 %v276
    %330 = vmatpush.msra.mxu0 %v275
    %331 = vmatpush.msra.mxu0 %v274
    %332 = vmatpush.msra.mxu0 %v273
    %333 = vmatpush.msra.mxu0 %v272
    %334 = vmatpush.msra.mxu0 %v271
    %335 = vmatpush.msra.mxu0 %v270
    %336 = vmatpush.msra.mxu0 %v269
    %337 = vmatmul.f32.gmra.mxu0 %v74
    %v338 = vpop.f32.mrf.mxu0
    %v339 = vadd.f32 %v319, %v338
    %340 = vdwg.mxu0
    %v341 = vld [vmem:[%s4] sm:$0x1]
    %v343 = vperm.slane %v341, 0
    %v345 = vadd.f32 %v339, %v343
    %v346 = vtanh.pop %v345
    %v347 = vld [vmem:[%s5] sm:$0xff]
    %v348 = vld [vmem:[%s5 + $0x8] sm:$0xff]
    %v349 = vld [vmem:[%s5 + $0x10] sm:$0xff]
    %v350 = vld [vmem:[%s5 + $0x18] sm:$0xff]
    %v351 = vld [vmem:[%s5 + $0x20] sm:$0xff]
    %v352 = vld [vmem:[%s5 + $0x28] sm:$0xff]
    %v353 = vld [vmem:[%s5 + $0x30] sm:$0xff]
    %v354 = vld [vmem:[%s5 + $0x38] sm:$0xff]
    %v355 = vld [vmem:[%s5 + $0x40] sm:$0xff]
    %v356 = vld [vmem:[%s5 + $0x48] sm:$0xff]
    %v357 = vld [vmem:[%s5 + $0x50] sm:$0xff]
    %v358 = vld [vmem:[%s5 + $0x58] sm:$0xff]
    %v359 = vld [vmem:[%s5 + $0x60] sm:$0xff]
    %v360 = vld [vmem:[%s5 + $0x68] sm:$0xff]
    %v361 = vld [vmem:[%s5 + $0x70] sm:$0xff]
    %v362 = vld [vmem:[%s5 + $0x78] sm:$0xff]
    %v363 = vld [vmem:[%s6] sm:$0x1]
    %v365 = vperm.slane %v363, 0
    %367 = vmatpush.msra.mxu0 %v362
    %368 = vmatpush.msra.mxu0 %v361
    %369 = vmatpush.msra.mxu0 %v360
    %370 = vmatpush.msra.mxu0 %v359
    %371 = vmatpush.msra.mxu0 %v358
    %372 = vmatpush.msra.mxu0 %v357
    %373 = vmatpush.msra.mxu0 %v356
    %374 = vmatpush.msra.mxu0 %v355
    %375 = vmatpush.msra.mxu0 %v354
    %376 = vmatpush.msra.mxu0 %v353
    %377 = vmatpush.msra.mxu0 %v352
    %378 = vmatpush.msra.mxu0 %v351
    %379 = vmatpush.msra.mxu0 %v350
    %380 = vmatpush.msra.mxu0 %v349
    %381 = vmatpush.msra.mxu0 %v348
    %382 = vmatpush.msra.mxu0 %v347
    %383 = vmatmul.f32.gmra.mxu0 %v346
    %v384 = vpop.f32.mrf.mxu0
    %v385 = vadd.f32 %v365, %v384
    %386 = vdwg.mxu0
    %vm387 = vcmask 261120
    %v388 = vsel %vm387, %v385, -inf
    %389 = vmax.xlane.f32.xlu0 %v388
    %v390 = vpop.xlane.xlu0 %389
    %v391 = vsub.f32 %v385, %v390
    %v392 = vmul.f32 %v391, 1.442695
    %v393 = vpow.pop %v392
    %v394 = vld [vmem:[%s7] sm:$0xff]
    %v395 = vld [vmem:[%s7 + $0x8] sm:$0xff]
    %v396 = vld [vmem:[%s7 + $0x10] sm:$0xff]
    %v397 = vld [vmem:[%s7 + $0x18] sm:$0xff]
    %v399 = vsel %vm387, %v393, 0
    %401 = vmatpush.msra.mxu0 0.0
    %402 = vmatpush.msra.mxu0 0.0
    %403 = vmatpush.msra.mxu0 0.0
    %404 = vmatpush.msra.mxu0 0.0
    %405 = vmatpush.msra.mxu0 0.0
    %406 = vmatpush.msra.mxu0 0.0
    %407 = vmatpush.msra.mxu0 0.0
    %408 = vmatpush.msra.mxu0 0.0
    %409 = vmatpush.msra.mxu0 0.0
    %410 = vmatpush.msra.mxu0 0.0
    %411 = vmatpush.msra.mxu0 0.0
    %412 = vmatpush.msra.mxu0 0.0
    %413 = vmatpush.msra.mxu0 %v397
    %414 = vmatpush.msra.mxu0 %v396
    %415 = vmatpush.msra.mxu0 %v395
    %416 = vmatpush.msra.mxu0 %v394
    %417 = vmatmul.f32.gmra.mxu0 %v399
    %v418 = vpop.f32.mrf.mxu0
    %v419 = vadd.f32 0.0, %v418
    %420 = vdwg.mxu0
    %v421 = vrcp.pop %v419
    %v422 = vmul.f32 %v419, %v421
    %v423 = vsub.f32 1.0, %v422
    %v424 = vmul.f32 %v421, %v423
    %v425 = vadd.f32 %v421, %v424
    %vm426 = vweird.f32 %v419
    %vm427 = vweird.f32 %v421
    %vm428 = vmor %vm426, %vm427
    %v429 = vsel %vm428, %v421, %v425
    %v430 = vand.u32 2147483647, %v419
    %vm431 = vcmp.eq.f32.partialorder %v430, 8.507059e+37
    %v432 = vand.u32 %v419, 2147483648
    %v433 = vor.u32 1.1754944e-38, %v432
    %v434 = vsel %vm431, %v433, %v429
    %v435 = vmul.f32 %v393, %v434
    %436 = vst.msk [vmem:[#allocation8] sm:$0xff] %vm387, %v435
    // Predicated region
    $region46: #{tpu_custom_call.1} parent=1 // pred_check
      _
    $region47: #{tpu_custom_call.1} parent=1 // pred_check_branch
      %438 = sbr.rel (0) target = $region49
    $region48: #{tpu_custom_call.1} parent=1 // pred_region
      %440 = vsyncadd [#allocation4], 0
      %s442 = sshll.u32 [#allocation8], 4
      %s443 = int_to_ptr.vmem [resolvable:$true] %s442
      %s444 = sshll.u32 %s8, 4
      %s445 = int_to_ptr.hbm [resolvable:$true] %s444
      %447 = dma.vmem_to_hbm [thread:$0]  %s443, 128, %s445, [#allocation4]
    $region49: #{tpu_custom_call.1} parent=1 // pred_fallthru
      _
    // Predicated region
    $region50: #{tpu_custom_call.1} parent=1 // pred_check
      _
    $region51: #{tpu_custom_call.1} parent=1 // pred_check_branch
      %449 = sbr.rel (0) target = $region53
    $region52: #{tpu_custom_call.1} parent=1 // pred_region
      %451 = dma.done [#allocation4], 128
    $region53: #{tpu_custom_call.1} parent=1 // pred_fallthru
      _
    %452 = vsyncpa [#allocation3], 1
    %453 = vsyncpa [#allocation6], 1
    %454 = vsyncpa [#allocation4], 1

</llo_original>
